<compile_context>
chip_gen: v7x
topology: tpu7x:2x2x1
jax: 0.10.0
libtpu: 0.0.40
codegen_flags: <defaults>
</compile_context>

<pallas_src>
import functools

import jax
import jax.numpy as jnp
from jax import lax
from jax.experimental import pallas as pl
from jax.experimental.pallas import tpu as pltpu


def _rnn_kernel(x_ref, win_t_ref, whh_t_ref, h0_ref,
                traj_ref, mean_ref, var_ref, *,
                alpha: float, seq_len: int, batch_pad: int,
                hidden: int, hidden_pad: int):
    """Whole-sequence CTRNN recurrence + mean/var head, single invocation.

    x_ref     : (T*B_pad, I)       flattened, batch-padded inputs (time-major)
    win_t_ref : (I, H_pad)         input2h.weight.T, lane-padded with zeros
    whh_t_ref : (H_pad, H_pad)     h2h.weight.T, padded with zeros
    h0_ref    : (1, H_pad)         trainable initial hidden state, padded
    traj_ref  : (T*B_pad, H_pad)   hidden-state trajectory (lane-dense)
    mean_ref  : (T*B_pad, 1)       mean over the H real lanes
    var_ref   : (T*B_pad, 1)       unbiased (ddof=1) variance over real lanes
    """
    # Hoisted input projection: one MXU matmul for all timesteps, off the
    # serial dependence chain.
    x_proj = jnp.dot(x_ref[...], win_t_ref[...],
                     preferred_element_type=jnp.float32)       # (T*B_pad, H_pad)

    whh_t = whh_t_ref[...]                                     # (H_pad, H_pad)

    # initial_hidden.repeat(batch, 1); padded rows/lanes start at 0 and (since
    # the padded rows of W_hh^T are zero) never feed back into real lanes.
    h = jnp.broadcast_to(h0_ref[...], (batch_pad, hidden_pad)).astype(jnp.float32)

    one_minus_alpha = 1.0 - alpha

    # Fully unrolled serial recurrence (T is small and static).
    for t in range(seq_len):
        pre = x_proj[t * batch_pad:(t + 1) * batch_pad, :] + jnp.dot(
            h, whh_t, preferred_element_type=jnp.float32)      # (B_pad, H_pad)
        h_cand = jax.nn.sigmoid(pre)                           # EUP
        h = h * one_minus_alpha + h_cand * alpha               # VPU blend
        # One full (8,128)-vreg, statically aligned, unmasked store per step
        # into the VMEM-resident output block.
        traj_ref[t * batch_pad:(t + 1) * batch_pad, :] = h

    # ---- Epilogue head (off the serial chain, reads trajectory from VMEM) ---
    traj = traj_ref[...]                                       # (T*B_pad, H_pad)
    lane_ids = lax.broadcasted_iota(jnp.int32, traj.shape, 1)
    lane_mask = lane_ids < hidden                              # exclude padded lanes
    masked = jnp.where(lane_mask, traj, 0.0)
    mean = jnp.sum(masked, axis=-1, keepdims=True) * (1.0 / hidden)
    diff = jnp.where(lane_mask, traj - mean, 0.0)
    var = jnp.sum(diff * diff, axis=-1, keepdims=True) * (1.0 / (hidden - 1))
    mean_ref[...] = mean
    var_ref[...] = var


def rnn_net_forward(x, w_in, w_hh, h0, *, alpha):
    """x: (T, B, I) float32.  w_in: (H, I), w_hh: (H, H), h0: (1, H).

    Returns (out, rnn_output) matching RNNNet.forward:
      out        : (T, B, 2)  with out[...,0] = mean over hidden,
                   out[...,1] = unbiased variance (= torch.std(...)**2)
      rnn_output : (T, B, H)  hidden-state trajectory
    """
    T, B, I = x.shape
    H = w_in.shape[0]

    # Sublane / lane padding for full-vreg recurrent state and unmasked stores.
    B_pad = max(8, ((B + 7) // 8) * 8)
    H_pad = max(128, ((H + 127) // 128) * 128)

    # One-time (init-style) zero padding in the wrapper.
    x_pad = jnp.pad(x, ((0, 0), (0, B_pad - B), (0, 0))).reshape(T * B_pad, I)
    win_t = jnp.pad(w_in.T, ((0, 0), (0, H_pad - H)))          # (I, H_pad)
    whh_t = jnp.pad(w_hh.T, ((0, H_pad - H), (0, H_pad - H)))  # (H_pad, H_pad)
    h0_p = jnp.pad(h0, ((0, 0), (0, H_pad - H)))               # (1, H_pad)

    kernel = functools.partial(_rnn_kernel, alpha=float(alpha), seq_len=T,
                               batch_pad=B_pad, hidden=H, hidden_pad=H_pad)

    # TODO(synk): for large T*B_pad*H_pad (v7x: 64 MiB VMEM) tile T as an
    # 'arbitrary' grid axis and carry h in a VMEM scratch; at T=8/B=2/H=32 a
    # single resident block is optimal.
    traj, mean_p, var_p = pl.pallas_call(
        kernel,
        out_shape=(
            jax.ShapeDtypeStruct((T * B_pad, H_pad), jnp.float32),
            jax.ShapeDtypeStruct((T * B_pad, 1), jnp.float32),
            jax.ShapeDtypeStruct((T * B_pad, 1), jnp.float32),
        ),
        grid_spec=pltpu.PrefetchScalarGridSpec(
            num_scalar_prefetch=0,
            grid=(1,),                                  # collapsed time grid
            in_specs=[
                pl.BlockSpec((T * B_pad, I), lambda i: (0, 0)),    # all of x
                pl.BlockSpec((I, H_pad), lambda i: (0, 0)),        # W_in^T
                pl.BlockSpec((H_pad, H_pad), lambda i: (0, 0)),    # W_hh^T
                pl.BlockSpec((1, H_pad), lambda i: (0, 0)),        # h0
            ],
            out_specs=(
                pl.BlockSpec((T * B_pad, H_pad), lambda i: (0, 0)),
                pl.BlockSpec((T * B_pad, 1), lambda i: (0, 0)),
                pl.BlockSpec((T * B_pad, 1), lambda i: (0, 0)),
            ),
        ),
        compiler_params=pltpu.CompilerParams(
            dimension_semantics=("arbitrary",),
        ),
    )(x_pad, win_t, whh_t, h0_p)

    # Strip padding; the padded lanes/rows hold harmless garbage by design.
    rnn_output = traj.reshape(T, B_pad, H_pad)[:, :B, :H]
    mean = mean_p.reshape(T, B_pad)[:, :B]
    var = var_p.reshape(T, B_pad)[:, :B]
    out = jnp.stack([mean, var], axis=-1)
    return out, rnn_output


def _reference(x, w_in, w_hh, h0, alpha):
    """Pure-JAX reference mirroring the PyTorch forward."""
    T, B, I = x.shape
    H = w_in.shape[0]
    h = jnp.broadcast_to(h0, (B, H))

    def step(h, x_t):
        pre = x_t @ w_in.T + h @ w_hh.T
        h_new = jax.nn.sigmoid(pre)
        h = h * (1 - alpha) + h_new * alpha
        return h, h

    _, outs = jax.lax.scan(step, h, x)
    mean = outs.mean(axis=-1)
    var = outs.var(axis=-1, ddof=1)
    return jnp.stack([mean, var], axis=-1), outs


if __name__ == "__main__":
    # Model hyperparameters (matching RNNNet(input_size, hidden_size, output_size))
    input_size = 4
    hidden_size = 32
    output_size = 3          # fc is unused in forward()
    tau, dt = 50, 1
    alpha = dt / tau

    seq_len = 8
    batch = 2

    key = jax.random.PRNGKey(0)
    k_x, k_win, k_whh, k_h0, k_fc = jax.random.split(key, 5)

    # Deterministic parameter init matching the PyTorch __init__ distributions.
    w_in = 0.5 * jax.random.normal(k_win, (hidden_size, input_size), jnp.float32)
    w_hh = (1.0 / jnp.sqrt(hidden_size)) * jax.random.normal(
        k_whh, (hidden_size, hidden_size), jnp.float32)
    h0 = jax.random.uniform(k_h0, (1, hidden_size), jnp.float32) * 2.0 - 1.0
    # TODO(synk): self.fc is created in RNNNet.__init__ but never used in
    # forward(); created here for parity only.
    w_fc = 0.5 * jax.random.normal(k_fc, (output_size, hidden_size), jnp.float32)

    x = jax.random.normal(k_x, (seq_len, batch, input_size), jnp.float32)

    out, rnn_output = rnn_net_forward(x, w_in, w_hh, h0, alpha=alpha)
    out = jax.block_until_ready(out)
    rnn_output = jax.block_until_ready(rnn_output)

    # sanity check against pure-JAX reference
    ref_out, ref_rnn = _reference(x, w_in, w_hh, h0, alpha)
    assert out.shape == (seq_len, batch, 2)
    assert rnn_output.shape == (seq_len, batch, hidden_size)
    assert jnp.allclose(rnn_output, ref_rnn, atol=1e-5, rtol=1e-5)
    assert jnp.allclose(out, ref_out, atol=1e-5, rtol=1e-5)

    print("KERNEL_OK")
</pallas_src>

<mosaic_0001>
module attributes {stable_mosaic.version = 11 : i64} {
  func.func @_rnn_kernel(%arg0: i32, %arg1: memref<64x4xf32, #tpu.memory_space<vmem>>, %arg2: memref<4x128xf32, #tpu.memory_space<vmem>>, %arg3: memref<128x128xf32, #tpu.memory_space<vmem>>, %arg4: memref<1x128xf32, #tpu.memory_space<vmem>>, %arg5: memref<64x128xf32, #tpu.memory_space<vmem>>, %arg6: memref<64x1xf32, #tpu.memory_space<vmem>>, %arg7: memref<64x1xf32, #tpu.memory_space<vmem>>) attributes {dimension_semantics = [#tpu.dimension_semantics<arbitrary>], iteration_bounds = array<i64: 1>, scalar_prefetch = 0 : i64, scratch_operands = 0 : i64, tpu.core_type = #tpu.core_type<tc>, window_params = [{pipeline_mode = #tpu.pipeline_mode<synchronous>, transform_indices = @transform_0, window_bounds = array<i64: 64, 4>}, {pipeline_mode = #tpu.pipeline_mode<synchronous>, transform_indices = @transform_1, window_bounds = array<i64: 4, 128>}, {pipeline_mode = #tpu.pipeline_mode<synchronous>, transform_indices = @transform_2, window_bounds = array<i64: 128, 128>}, {pipeline_mode = #tpu.pipeline_mode<synchronous>, transform_indices = @transform_3, window_bounds = array<i64: 1, 128>}, {pipeline_mode = #tpu.pipeline_mode<synchronous>, transform_indices = @transform_4, window_bounds = array<i64: 64, 128>}, {pipeline_mode = #tpu.pipeline_mode<synchronous>, transform_indices = @transform_5, window_bounds = array<i64: 64, 1>}, {pipeline_mode = #tpu.pipeline_mode<synchronous>, transform_indices = @transform_6, window_bounds = array<i64: 64, 1>}]} {
    %c0 = arith.constant 0 : index
    %c0_0 = arith.constant 0 : index
    %0 = vector.load %arg1[%c0, %c0_0] : memref<64x4xf32, #tpu.memory_space<vmem>>, vector<64x4xf32>
    %c0_1 = arith.constant 0 : index
    %c0_2 = arith.constant 0 : index
    %1 = vector.load %arg2[%c0_1, %c0_2] : memref<4x128xf32, #tpu.memory_space<vmem>>, vector<4x128xf32>
    %cst = arith.constant dense<0.000000e+00> : vector<64x128xf32>
    %2 = tpu.matmul %0, %1, %cst {dimension_numbers = #tpu.dot_dimension_numbers<[1], [0], [0], [1], [0, 0, 1, 1], [], []>} : vector<64x4xf32>, vector<4x128xf32>, vector<64x128xf32> -> vector<64x128xf32>
    %c0_3 = arith.constant 0 : index
    %c0_4 = arith.constant 0 : index
    %3 = vector.load %arg3[%c0_3, %c0_4] : memref<128x128xf32, #tpu.memory_space<vmem>>, vector<128x128xf32>
    %c0_5 = arith.constant 0 : index
    %c0_6 = arith.constant 0 : index
    %4 = vector.load %arg4[%c0_5, %c0_6] : memref<1x128xf32, #tpu.memory_space<vmem>>, vector<1x128xf32>
    %5 = vector.shape_cast %4 : vector<1x128xf32> to vector<1x128xf32>
    %6 = vector.broadcast %5 : vector<1x128xf32> to vector<8x128xf32>
    %7 = vector.extract_strided_slice %2 {offsets = [0, 0], sizes = [8, 128], strides = [1, 1]} : vector<64x128xf32> to vector<8x128xf32>
    %cst_7 = arith.constant dense<0.000000e+00> : vector<8x128xf32>
    %8 = tpu.matmul %6, %3, %cst_7 {dimension_numbers = #tpu.dot_dimension_numbers<[1], [0], [0], [1], [0, 0, 1, 1], [], []>} : vector<8x128xf32>, vector<128x128xf32>, vector<8x128xf32> -> vector<8x128xf32>
    %9 = arith.addf %7, %8 : vector<8x128xf32>
    %10 = arith.negf %9 : vector<8x128xf32>
    %11 = math.exp %10 : vector<8x128xf32>
    %cst_8 = arith.constant 1.000000e+00 : f32
    %12 = vector.broadcast %cst_8 : f32 to vector<8x128xf32>
    %13 = arith.addf %12, %11 : vector<8x128xf32>
    %14 = arith.divf %12, %13 : vector<8x128xf32>
    %cst_9 = arith.constant 9.800000e-01 : f32
    %15 = vector.broadcast %cst_9 : f32 to vector<8x128xf32>
    %16 = arith.mulf %6, %15 : vector<8x128xf32>
    %cst_10 = arith.constant 2.000000e-02 : f32
    %17 = vector.broadcast %cst_10 : f32 to vector<8x128xf32>
    %18 = arith.mulf %14, %17 : vector<8x128xf32>
    %19 = arith.addf %16, %18 : vector<8x128xf32>
    %c0_11 = arith.constant 0 : index
    %c0_12 = arith.constant 0 : index
    %20 = vector.load %arg5[%c0_11, %c0_12] : memref<64x128xf32, #tpu.memory_space<vmem>>, vector<8x128xf32>
    tpu.vector_store %arg5[%c0_11, %c0_12], %19 {strides = array<i32>} : memref<64x128xf32, #tpu.memory_space<vmem>>, vector<8x128xf32>,
    %21 = vector.extract_strided_slice %2 {offsets = [8, 0], sizes = [8, 128], strides = [1, 1]} : vector<64x128xf32> to vector<8x128xf32>
    %cst_13 = arith.constant dense<0.000000e+00> : vector<8x128xf32>
    %22 = tpu.matmul %19, %3, %cst_13 {dimension_numbers = #tpu.dot_dimension_numbers<[1], [0], [0], [1], [0, 0, 1, 1], [], []>} : vector<8x128xf32>, vector<128x128xf32>, vector<8x128xf32> -> vector<8x128xf32>
    %23 = arith.addf %21, %22 : vector<8x128xf32>
    %24 = arith.negf %23 : vector<8x128xf32>
    %25 = math.exp %24 : vector<8x128xf32>
    %cst_14 = arith.constant 1.000000e+00 : f32
    %26 = vector.broadcast %cst_14 : f32 to vector<8x128xf32>
    %27 = arith.addf %26, %25 : vector<8x128xf32>
    %28 = arith.divf %26, %27 : vector<8x128xf32>
    %cst_15 = arith.constant 9.800000e-01 : f32
    %29 = vector.broadcast %cst_15 : f32 to vector<8x128xf32>
    %30 = arith.mulf %19, %29 : vector<8x128xf32>
    %cst_16 = arith.constant 2.000000e-02 : f32
    %31 = vector.broadcast %cst_16 : f32 to vector<8x128xf32>
    %32 = arith.mulf %28, %31 : vector<8x128xf32>
    %33 = arith.addf %30, %32 : vector<8x128xf32>
    %c8 = arith.constant 8 : index
    %c0_17 = arith.constant 0 : index
    %34 = vector.load %arg5[%c8, %c0_17] : memref<64x128xf32, #tpu.memory_space<vmem>>, vector<8x128xf32>
    tpu.vector_store %arg5[%c8, %c0_17], %33 {strides = array<i32>} : memref<64x128xf32, #tpu.memory_space<vmem>>, vector<8x128xf32>,
    %35 = vector.extract_strided_slice %2 {offsets = [16, 0], sizes = [8, 128], strides = [1, 1]} : vector<64x128xf32> to vector<8x128xf32>
    %cst_18 = arith.constant dense<0.000000e+00> : vector<8x128xf32>
    %36 = tpu.matmul %33, %3, %cst_18 {dimension_numbers = #tpu.dot_dimension_numbers<[1], [0], [0], [1], [0, 0, 1, 1], [], []>} : vector<8x128xf32>, vector<128x128xf32>, vector<8x128xf32> -> vector<8x128xf32>
    %37 = arith.addf %35, %36 : vector<8x128xf32>
    %38 = arith.negf %37 : vector<8x128xf32>
    %39 = math.exp %38 : vector<8x128xf32>
    %cst_19 = arith.constant 1.000000e+00 : f32
    %40 = vector.broadcast %cst_19 : f32 to vector<8x128xf32>
    %41 = arith.addf %40, %39 : vector<8x128xf32>
    %42 = arith.divf %40, %41 : vector<8x128xf32>
    %cst_20 = arith.constant 9.800000e-01 : f32
    %43 = vector.broadcast %cst_20 : f32 to vector<8x128xf32>
    %44 = arith.mulf %33, %43 : vector<8x128xf32>
    %cst_21 = arith.constant 2.000000e-02 : f32
    %45 = vector.broadcast %cst_21 : f32 to vector<8x128xf32>
    %46 = arith.mulf %42, %45 : vector<8x128xf32>
    %47 = arith.addf %44, %46 : vector<8x128xf32>
    %c16 = arith.constant 16 : index
    %c0_22 = arith.constant 0 : index
    %48 = vector.load %arg5[%c16, %c0_22] : memref<64x128xf32, #tpu.memory_space<vmem>>, vector<8x128xf32>
    tpu.vector_store %arg5[%c16, %c0_22], %47 {strides = array<i32>} : memref<64x128xf32, #tpu.memory_space<vmem>>, vector<8x128xf32>,
    %49 = vector.extract_strided_slice %2 {offsets = [24, 0], sizes = [8, 128], strides = [1, 1]} : vector<64x128xf32> to vector<8x128xf32>
    %cst_23 = arith.constant dense<0.000000e+00> : vector<8x128xf32>
    %50 = tpu.matmul %47, %3, %cst_23 {dimension_numbers = #tpu.dot_dimension_numbers<[1], [0], [0], [1], [0, 0, 1, 1], [], []>} : vector<8x128xf32>, vector<128x128xf32>, vector<8x128xf32> -> vector<8x128xf32>
    %51 = arith.addf %49, %50 : vector<8x128xf32>
    %52 = arith.negf %51 : vector<8x128xf32>
    %53 = math.exp %52 : vector<8x128xf32>
    %cst_24 = arith.constant 1.000000e+00 : f32
    %54 = vector.broadcast %cst_24 : f32 to vector<8x128xf32>
    %55 = arith.addf %54, %53 : vector<8x128xf32>
    %56 = arith.divf %54, %55 : vector<8x128xf32>
    %cst_25 = arith.constant 9.800000e-01 : f32
    %57 = vector.broadcast %cst_25 : f32 to vector<8x128xf32>
    %58 = arith.mulf %47, %57 : vector<8x128xf32>
    %cst_26 = arith.constant 2.000000e-02 : f32
    %59 = vector.broadcast %cst_26 : f32 to vector<8x128xf32>
    %60 = arith.mulf %56, %59 : vector<8x128xf32>
    %61 = arith.addf %58, %60 : vector<8x128xf32>
    %c24 = arith.constant 24 : index
    %c0_27 = arith.constant 0 : index
    %62 = vector.load %arg5[%c24, %c0_27] : memref<64x128xf32, #tpu.memory_space<vmem>>, vector<8x128xf32>
    tpu.vector_store %arg5[%c24, %c0_27], %61 {strides = array<i32>} : memref<64x128xf32, #tpu.memory_space<vmem>>, vector<8x128xf32>,
    %63 = vector.extract_strided_slice %2 {offsets = [32, 0], sizes = [8, 128], strides = [1, 1]} : vector<64x128xf32> to vector<8x128xf32>
    %cst_28 = arith.constant dense<0.000000e+00> : vector<8x128xf32>
    %64 = tpu.matmul %61, %3, %cst_28 {dimension_numbers = #tpu.dot_dimension_numbers<[1], [0], [0], [1], [0, 0, 1, 1], [], []>} : vector<8x128xf32>, vector<128x128xf32>, vector<8x128xf32> -> vector<8x128xf32>
    %65 = arith.addf %63, %64 : vector<8x128xf32>
    %66 = arith.negf %65 : vector<8x128xf32>
    %67 = math.exp %66 : vector<8x128xf32>
    %cst_29 = arith.constant 1.000000e+00 : f32
    %68 = vector.broadcast %cst_29 : f32 to vector<8x128xf32>
    %69 = arith.addf %68, %67 : vector<8x128xf32>
    %70 = arith.divf %68, %69 : vector<8x128xf32>
    %cst_30 = arith.constant 9.800000e-01 : f32
    %71 = vector.broadcast %cst_30 : f32 to vector<8x128xf32>
    %72 = arith.mulf %61, %71 : vector<8x128xf32>
    %cst_31 = arith.constant 2.000000e-02 : f32
    %73 = vector.broadcast %cst_31 : f32 to vector<8x128xf32>
    %74 = arith.mulf %70, %73 : vector<8x128xf32>
    %75 = arith.addf %72, %74 : vector<8x128xf32>
    %c32 = arith.constant 32 : index
    %c0_32 = arith.constant 0 : index
    %76 = vector.load %arg5[%c32, %c0_32] : memref<64x128xf32, #tpu.memory_space<vmem>>, vector<8x128xf32>
    tpu.vector_store %arg5[%c32, %c0_32], %75 {strides = array<i32>} : memref<64x128xf32, #tpu.memory_space<vmem>>, vector<8x128xf32>,
    %77 = vector.extract_strided_slice %2 {offsets = [40, 0], sizes = [8, 128], strides = [1, 1]} : vector<64x128xf32> to vector<8x128xf32>
    %cst_33 = arith.constant dense<0.000000e+00> : vector<8x128xf32>
    %78 = tpu.matmul %75, %3, %cst_33 {dimension_numbers = #tpu.dot_dimension_numbers<[1], [0], [0], [1], [0, 0, 1, 1], [], []>} : vector<8x128xf32>, vector<128x128xf32>, vector<8x128xf32> -> vector<8x128xf32>
    %79 = arith.addf %77, %78 : vector<8x128xf32>
    %80 = arith.negf %79 : vector<8x128xf32>
    %81 = math.exp %80 : vector<8x128xf32>
    %cst_34 = arith.constant 1.000000e+00 : f32
    %82 = vector.broadcast %cst_34 : f32 to vector<8x128xf32>
    %83 = arith.addf %82, %81 : vector<8x128xf32>
    %84 = arith.divf %82, %83 : vector<8x128xf32>
    %cst_35 = arith.constant 9.800000e-01 : f32
    %85 = vector.broadcast %cst_35 : f32 to vector<8x128xf32>
    %86 = arith.mulf %75, %85 : vector<8x128xf32>
    %cst_36 = arith.constant 2.000000e-02 : f32
    %87 = vector.broadcast %cst_36 : f32 to vector<8x128xf32>
    %88 = arith.mulf %84, %87 : vector<8x128xf32>
    %89 = arith.addf %86, %88 : vector<8x128xf32>
    %c40 = arith.constant 40 : index
    %c0_37 = arith.constant 0 : index
    %90 = vector.load %arg5[%c40, %c0_37] : memref<64x128xf32, #tpu.memory_space<vmem>>, vector<8x128xf32>
    tpu.vector_store %arg5[%c40, %c0_37], %89 {strides = array<i32>} : memref<64x128xf32, #tpu.memory_space<vmem>>, vector<8x128xf32>,
    %91 = vector.extract_strided_slice %2 {offsets = [48, 0], sizes = [8, 128], strides = [1, 1]} : vector<64x128xf32> to vector<8x128xf32>
    %cst_38 = arith.constant dense<0.000000e+00> : vector<8x128xf32>
    %92 = tpu.matmul %89, %3, %cst_38 {dimension_numbers = #tpu.dot_dimension_numbers<[1], [0], [0], [1], [0, 0, 1, 1], [], []>} : vector<8x128xf32>, vector<128x128xf32>, vector<8x128xf32> -> vector<8x128xf32>
    %93 = arith.addf %91, %92 : vector<8x128xf32>
    %94 = arith.negf %93 : vector<8x128xf32>
    %95 = math.exp %94 : vector<8x128xf32>
    %cst_39 = arith.constant 1.000000e+00 : f32
    %96 = vector.broadcast %cst_39 : f32 to vector<8x128xf32>
    %97 = arith.addf %96, %95 : vector<8x128xf32>
    %98 = arith.divf %96, %97 : vector<8x128xf32>
    %cst_40 = arith.constant 9.800000e-01 : f32
    %99 = vector.broadcast %cst_40 : f32 to vector<8x128xf32>
    %100 = arith.mulf %89, %99 : vector<8x128xf32>
    %cst_41 = arith.constant 2.000000e-02 : f32
    %101 = vector.broadcast %cst_41 : f32 to vector<8x128xf32>
    %102 = arith.mulf %98, %101 : vector<8x128xf32>
    %103 = arith.addf %100, %102 : vector<8x128xf32>
    %c48 = arith.constant 48 : index
    %c0_42 = arith.constant 0 : index
    %104 = vector.load %arg5[%c48, %c0_42] : memref<64x128xf32, #tpu.memory_space<vmem>>, vector<8x128xf32>
    tpu.vector_store %arg5[%c48, %c0_42], %103 {strides = array<i32>} : memref<64x128xf32, #tpu.memory_space<vmem>>, vector<8x128xf32>,
    %105 = vector.extract_strided_slice %2 {offsets = [56, 0], sizes = [8, 128], strides = [1, 1]} : vector<64x128xf32> to vector<8x128xf32>
    %cst_43 = arith.constant dense<0.000000e+00> : vector<8x128xf32>
    %106 = tpu.matmul %103, %3, %cst_43 {dimension_numbers = #tpu.dot_dimension_numbers<[1], [0], [0], [1], [0, 0, 1, 1], [], []>} : vector<8x128xf32>, vector<128x128xf32>, vector<8x128xf32> -> vector<8x128xf32>
    %107 = arith.addf %105, %106 : vector<8x128xf32>
    %108 = arith.negf %107 : vector<8x128xf32>
    %109 = math.exp %108 : vector<8x128xf32>
    %cst_44 = arith.constant 1.000000e+00 : f32
    %110 = vector.broadcast %cst_44 : f32 to vector<8x128xf32>
    %111 = arith.addf %110, %109 : vector<8x128xf32>
    %112 = arith.divf %110, %111 : vector<8x128xf32>
    %cst_45 = arith.constant 9.800000e-01 : f32
    %113 = vector.broadcast %cst_45 : f32 to vector<8x128xf32>
    %114 = arith.mulf %103, %113 : vector<8x128xf32>
    %cst_46 = arith.constant 2.000000e-02 : f32
    %115 = vector.broadcast %cst_46 : f32 to vector<8x128xf32>
    %116 = arith.mulf %112, %115 : vector<8x128xf32>
    %117 = arith.addf %114, %116 : vector<8x128xf32>
    %c56 = arith.constant 56 : index
    %c0_47 = arith.constant 0 : index
    %118 = vector.load %arg5[%c56, %c0_47] : memref<64x128xf32, #tpu.memory_space<vmem>>, vector<8x128xf32>
    tpu.vector_store %arg5[%c56, %c0_47], %117 {strides = array<i32>} : memref<64x128xf32, #tpu.memory_space<vmem>>, vector<8x128xf32>,
    %c0_48 = arith.constant 0 : index
    %c0_49 = arith.constant 0 : index
    %119 = vector.load %arg5[%c0_48, %c0_49] : memref<64x128xf32, #tpu.memory_space<vmem>>, vector<64x128xf32>
    %120 = tpu.iota {dimensions = array<i32: 1>} : vector<64x128xi32>
    %c32_i32 = arith.constant 32 : i32
    %121 = vector.broadcast %c32_i32 : i32 to vector<64x128xi32>
    %122 = arith.cmpi slt, %120, %121 : vector<64x128xi32>
    %cst_50 = arith.constant 0.000000e+00 : f32
    %123 = vector.broadcast %cst_50 : f32 to vector<64x128xf32>
    %124 = arith.select %122, %119, %123 : vector<64x128xi1>, vector<64x128xf32>
    %cst_51 = arith.constant dense<0.000000e+00> : vector<64xf32>
    %125 = vector.multi_reduction <add>, %124, %cst_51 [1] : vector<64x128xf32> to vector<64xf32>
    %126 = vector.shape_cast %125 : vector<64xf32> to vector<64x1xf32>
    %cst_52 = arith.constant 3.125000e-02 : f32
    %127 = vector.broadcast %cst_52 : f32 to vector<64x1xf32>
    %128 = arith.mulf %126, %127 : vector<64x1xf32>
    %129 = vector.broadcast %128 : vector<64x1xf32> to vector<64x128xf32>
    %130 = arith.subf %119, %129 : vector<64x128xf32>
    %cst_53 = arith.constant 0.000000e+00 : f32
    %131 = vector.broadcast %cst_53 : f32 to vector<64x128xf32>
    %132 = arith.select %122, %130, %131 : vector<64x128xi1>, vector<64x128xf32>
    %133 = arith.mulf %132, %132 : vector<64x128xf32>
    %cst_54 = arith.constant dense<0.000000e+00> : vector<64xf32>
    %134 = vector.multi_reduction <add>, %133, %cst_54 [1] : vector<64x128xf32> to vector<64xf32>
    %135 = vector.shape_cast %134 : vector<64xf32> to vector<64x1xf32>
    %cst_55 = arith.constant 0.0322580636 : f32
    %136 = vector.broadcast %cst_55 : f32 to vector<64x1xf32>
    %137 = arith.mulf %135, %136 : vector<64x1xf32>
    %c0_56 = arith.constant 0 : index
    %c0_57 = arith.constant 0 : index
    %138 = vector.load %arg6[%c0_56, %c0_57] : memref<64x1xf32, #tpu.memory_space<vmem>>, vector<64x1xf32>
    tpu.vector_store %arg6[%c0_56, %c0_57], %128 {strides = array<i32>} : memref<64x1xf32, #tpu.memory_space<vmem>>, vector<64x1xf32>,
    %c0_58 = arith.constant 0 : index
    %c0_59 = arith.constant 0 : index
    %139 = vector.load %arg7[%c0_58, %c0_59] : memref<64x1xf32, #tpu.memory_space<vmem>>, vector<64x1xf32>
    tpu.vector_store %arg7[%c0_58, %c0_59], %137 {strides = array<i32>} : memref<64x1xf32, #tpu.memory_space<vmem>>, vector<64x1xf32>,
    return
  }
  func.func @transform_0(%arg0: i32) -> (i32, i32) {
    %c0_i32 = arith.constant 0 : i32
    %c0_i32_0 = arith.constant 0 : i32
    %c0_i32_1 = arith.constant 0 : i32
    return %c0_i32, %c0_i32_0 : i32, i32
  }
  func.func @transform_1(%arg0: i32) -> (i32, i32) {
    %c0_i32 = arith.constant 0 : i32
    %c0_i32_0 = arith.constant 0 : i32
    %c0_i32_1 = arith.constant 0 : i32
    return %c0_i32, %c0_i32_0 : i32, i32
  }
  func.func @transform_2(%arg0: i32) -> (i32, i32) {
    %c0_i32 = arith.constant 0 : i32
    %c0_i32_0 = arith.constant 0 : i32
    %c0_i32_1 = arith.constant 0 : i32
    return %c0_i32, %c0_i32_0 : i32, i32
  }
  func.func @transform_3(%arg0: i32) -> (i32, i32) {
    %c0_i32 = arith.constant 0 : i32
    %c0_i32_0 = arith.constant 0 : i32
    %c0_i32_1 = arith.constant 0 : i32
    return %c0_i32, %c0_i32_0 : i32, i32
  }
  func.func @transform_4(%arg0: i32) -> (i32, i32) {
    %c0_i32 = arith.constant 0 : i32
    %c0_i32_0 = arith.constant 0 : i32
    %c0_i32_1 = arith.constant 0 : i32
    return %c0_i32, %c0_i32_0 : i32, i32
  }
  func.func @transform_5(%arg0: i32) -> (i32, i32) {
    %c0_i32 = arith.constant 0 : i32
    %c0_i32_0 = arith.constant 0 : i32
    %c0_i32_1 = arith.constant 0 : i32
    return %c0_i32, %c0_i32_0 : i32, i32
  }
  func.func @transform_6(%arg0: i32) -> (i32, i32) {
    %c0_i32 = arith.constant 0 : i32
    %c0_i32_0 = arith.constant 0 : i32
    %c0_i32_1 = arith.constant 0 : i32
    return %c0_i32, %c0_i32_0 : i32, i32
  }
}

</mosaic_0001>

<llo_original>
// kernel: tpu_custom_call.1
$region0: #{tpu_custom_call.1}
  #allocation0 [shape = 'u32[]', space=smem, size = 0x4, offset = 0x4, fixed_abs, tag = 'smem constant byte address 0x4 - core index']
  #allocation1 [shape = 'u32[144,128]{1,0:T(1,128)}', space=vmem, size = 0x12000, scoped, tag = 'internal scratch']
  %s0 = inlined_call_operand.vmem [shape: f32[64,4], index: 0, kind: input, shape index: {}]
  %s1 = inlined_call_operand.vmem [shape: f32[4,128], index: 1, kind: input, shape index: {}]
  %s2 = inlined_call_operand.hbm [shape: f32[128,128], index: 2, kind: input, shape index: {}]
  %s3 = inlined_call_operand.vmem [shape: f32[1,128], index: 3, kind: input, shape index: {}]
  %s4 = inlined_call_operand.hbm [shape: f32[64,128], index: 4, kind: output, shape index: {0}]
  %s5 = inlined_call_operand.vmem [shape: f32[64,1], index: 5, kind: output, shape index: {1}]
  %s6 = inlined_call_operand.vmem [shape: f32[64,1], index: 6, kind: output, shape index: {2}]
  %7 = xla_tuple %s4, %s5, %s6
  %s8 = sld [smem:[#allocation0]]
  $region46: #{tpu_custom_call.1} parent=0
    _
  %s10 = ssub.s32 1, %s8
  %s11 = scalar_select 0, %s10, %s8
  $region1: #{tpu_custom_call.1} parent=0
    #allocation2 [shape = 'u8[65536]{0}', space=vmem, size = 0x10000, scoped, tag = 'input window, operand 2, single buffered']
    #allocation3 [shape = 's32[1]{0}', space=sflag, size = 0x4, scoped, tag = 'scoped memory for tpu_custom_call.1']
    #allocation4 [shape = 's32[1]{0}', space=sflag, size = 0x4, scoped, tag = 'scoped memory for tpu_custom_call.1']
    #allocation5 [shape = 'u8[32768]{0}', space=vmem, size = 0x8000, scoped, tag = 'output window, operand 0, single buffered']
    %12 = vsyncpa [#allocation3], 0
    %13 = vsyncpa [#allocation4], 0
    // Predicated region
    $region2: #{tpu_custom_call.1} parent=1 // pred_check
      _
    $region3: #{tpu_custom_call.1} parent=1 // pred_check_branch
      %15 = sbr.rel (0) target = $region5
    $region4: #{tpu_custom_call.1} parent=1 // pred_region
      _
    $region5: #{tpu_custom_call.1} parent=1 // pred_fallthru
      _
    // Predicated region
    $region6: #{tpu_custom_call.1} parent=1 // pred_check
      _
    $region7: #{tpu_custom_call.1} parent=1 // pred_check_branch
      %17 = sbr.rel (0) target = $region9
    $region8: #{tpu_custom_call.1} parent=1 // pred_region
      _
    $region9: #{tpu_custom_call.1} parent=1 // pred_fallthru
      _
    // Predicated region
    $region10: #{tpu_custom_call.1} parent=1 // pred_check
      _
    $region11: #{tpu_custom_call.1} parent=1 // pred_check_branch
      %19 = sbr.rel (0) target = $region13
    $region12: #{tpu_custom_call.1} parent=1 // pred_region
      %s21 = ssub.s32 2048, 2048
      %22 = vsyncadd [#allocation3], %s21
      %s23 = sshll.u32 [#allocation2], 4
      %s24 = int_to_ptr.vmem [resolvable:$true] %s23
      %29 = dma.hbm_to_vmem [thread:$0]  %s2, 2048, %s24, [#allocation3], 128, 128, 8
    $region13: #{tpu_custom_call.1} parent=1 // pred_fallthru
      _
    // Predicated region
    $region14: #{tpu_custom_call.1} parent=1 // pred_check
      _
    $region15: #{tpu_custom_call.1} parent=1 // pred_check_branch
      %31 = sbr.rel (0) target = $region17
    $region16: #{tpu_custom_call.1} parent=1 // pred_region
      _
    $region17: #{tpu_custom_call.1} parent=1 // pred_fallthru
      _
    // Predicated region
    $region18: #{tpu_custom_call.1} parent=1 // pred_check
      _
    $region19: #{tpu_custom_call.1} parent=1 // pred_check_branch
      %33 = sbr.rel (0) target = $region21
    $region20: #{tpu_custom_call.1} parent=1 // pred_region
      %34 = dma.done [#allocation3], 2048
    $region21: #{tpu_custom_call.1} parent=1 // pred_fallthru
      _
    %v35 = vld [vmem:[%s0] sm:$0xff]
    %v36 = vld [vmem:[%s0 + $0x8] sm:$0xff]
    %v37 = vld [vmem:[%s0 + $0x10] sm:$0xff]
    %v38 = vld [vmem:[%s0 + $0x18] sm:$0xff]
    %v39 = vld [vmem:[%s0 + $0x20] sm:$0xff]
    %v40 = vld [vmem:[%s0 + $0x28] sm:$0xff]
    %v41 = vld [vmem:[%s0 + $0x30] sm:$0xff]
    %v42 = vld [vmem:[%s0 + $0x38] sm:$0xff]
    %v43 = vld [vmem:[%s1] sm:$0xf]
    %vm44 = vcmask 31744
    %v46 = vsel %vm44, %v35, 0
    %v49 = vsel %vm44, %v36, 0
    %v52 = vsel %vm44, %v37, 0
    %v55 = vsel %vm44, %v38, 0
    %v58 = vsel %vm44, %v39, 0
    %v61 = vsel %vm44, %v40, 0
    %v64 = vsel %vm44, %v41, 0
    %v67 = vsel %vm44, %v42, 0
    %vm69 = vcmask 1043456
    %v71 = vsel %vm69, %v43, 0
    %73 = vmatprep.subr.mxu0 0.0
    %74 = vmatpush1.msra.mxu0 %v71
    %75 = vmatprep.subr.mxu0 0.0
    %76 = vmatpush1.msra.mxu0 0.0
    %77 = vmatprep.subr.mxu0 0.0
    %78 = vmatpush1.msra.mxu0 0.0
    %79 = vmatprep.subr.mxu0 0.0
    %80 = vmatpush1.msra.mxu0 0.0
    %81 = vmatprep.subr.mxu0 0.0
    %82 = vmatpush1.msra.mxu0 0.0
    %83 = vmatprep.subr.mxu0 0.0
    %84 = vmatpush1.msra.mxu0 0.0
    %85 = vmatprep.subr.mxu0 0.0
    %86 = vmatpush1.msra.mxu0 0.0
    %87 = vmatprep.subr.mxu0 0.0
    %88 = vmatpush1.msra.mxu0 0.0
    %89 = vmatprep.subr.mxu0 0.0
    %90 = vmatpush1.msra.mxu0 0.0
    %91 = vmatprep.subr.mxu0 0.0
    %92 = vmatpush1.msra.mxu0 0.0
    %93 = vmatprep.subr.mxu0 0.0
    %94 = vmatpush1.msra.mxu0 0.0
    %95 = vmatprep.subr.mxu0 0.0
    %96 = vmatpush1.msra.mxu0 0.0
    %97 = vmatprep.subr.mxu0 0.0
    %98 = vmatpush1.msra.mxu0 0.0
    %99 = vmatprep.subr.mxu0 0.0
    %100 = vmatpush1.msra.mxu0 0.0
    %101 = vmatprep.subr.mxu0 0.0
    %102 = vmatpush1.msra.mxu0 0.0
    %103 = vmatprep.subr.mxu0 0.0
    %104 = vmatpush1.msra.mxu0 0.0
    %105 = vmatprep.subr.mxu0 0.0
    %106 = vmatpush1.msra.mxu0 0.0
    %107 = vmatprep.subr.mxu0 0.0
    %108 = vmatpush1.msra.mxu0 0.0
    %109 = vmatprep.subr.mxu0 0.0
    %110 = vmatpush1.msra.mxu0 0.0
    %111 = vmatprep.subr.mxu0 0.0
    %112 = vmatpush1.msra.mxu0 0.0
    %113 = vmatprep.subr.mxu0 0.0
    %114 = vmatpush1.msra.mxu0 0.0
    %115 = vmatprep.subr.mxu0 0.0
    %116 = vmatpush1.msra.mxu0 0.0
    %117 = vmatprep.subr.mxu0 0.0
    %118 = vmatpush1.msra.mxu0 0.0
    %119 = vmatprep.subr.mxu0 0.0
    %120 = vmatpush1.msra.mxu0 0.0
    %121 = vmatprep.subr.mxu0 0.0
    %122 = vmatpush1.msra.mxu0 0.0
    %123 = vmatprep.subr.mxu0 0.0
    %124 = vmatpush1.msra.mxu0 0.0
    %125 = vmatprep.subr.mxu0 0.0
    %126 = vmatpush1.msra.mxu0 0.0
    %127 = vmatprep.subr.mxu0 0.0
    %128 = vmatpush1.msra.mxu0 0.0
    %129 = vmatprep.subr.mxu0 0.0
    %130 = vmatpush1.msra.mxu0 0.0
    %131 = vmatprep.subr.mxu0 0.0
    %132 = vmatpush1.msra.mxu0 0.0
    %133 = vmatprep.subr.mxu0 0.0
    %134 = vmatpush1.msra.mxu0 0.0
    %135 = vmatprep.subr.mxu0 0.0
    %136 = vmatpush1.msra.mxu0 0.0
    %137 = vmatprep.mubr.f32.mxu0 0.0
    %138 = vmatmul.mubr.f32.gmra.mrb[0].mxu0 %v46
    %v139 = vpop.f32.mrb[0].mxu0
    %v140 = vadd.f32 0.0, %v139
    %v141 = vpop.f32.mrb[0].mxu0
    %142 = vmatprep.mubr.f32.mxu0 0.0
    %143 = vmatmul.mubr.f32.gmra.mrb[0].mxu0 %v49
    %v144 = vpop.f32.mrb[0].mxu0
    %v145 = vadd.f32 0.0, %v144
    %v146 = vpop.f32.mrb[0].mxu0
    %147 = vmatprep.mubr.f32.mxu0 0.0
    %148 = vmatmul.mubr.f32.gmra.mrb[0].mxu0 %v52
    %v149 = vpop.f32.mrb[0].mxu0
    %v150 = vadd.f32 0.0, %v149
    %v151 = vpop.f32.mrb[0].mxu0
    %152 = vmatprep.mubr.f32.mxu0 0.0
    %153 = vmatmul.mubr.f32.gmra.mrb[0].mxu0 %v55
    %v154 = vpop.f32.mrb[0].mxu0
    %v155 = vadd.f32 0.0, %v154
    %v156 = vpop.f32.mrb[0].mxu0
    %157 = vmatprep.mubr.f32.mxu0 0.0
    %158 = vmatmul.mubr.f32.gmra.mrb[0].mxu0 %v58
    %v159 = vpop.f32.mrb[0].mxu0
    %v160 = vadd.f32 0.0, %v159
    %v161 = vpop.f32.mrb[0].mxu0
    %162 = vmatprep.mubr.f32.mxu0 0.0
    %163 = vmatmul.mubr.f32.gmra.mrb[0].mxu0 %v61
    %v164 = vpop.f32.mrb[0].mxu0
    %v165 = vadd.f32 0.0, %v164
    %v166 = vpop.f32.mrb[0].mxu0
    %167 = vmatprep.mubr.f32.mxu0 0.0
    %168 = vmatmul.mubr.f32.gmra.mrb[0].mxu0 %v64
    %v169 = vpop.f32.mrb[0].mxu0
    %v170 = vadd.f32 0.0, %v169
    %v171 = vpop.f32.mrb[0].mxu0
    %172 = vmatprep.mubr.f32.mxu0 0.0
    %173 = vmatmul.mubr.f32.gmra.mrb[0].mxu0 %v67
    %v174 = vpop.f32.mrb[0].mxu0
    %v175 = vadd.f32 0.0, %v174
    %v176 = vpop.f32.mrb[0].mxu0
    %177 = vdwg.mxu0
    %v178 = vld [vmem:[#allocation2] sm:$0xff]
    %v179 = vld [vmem:[#allocation2 + $0x8] sm:$0xff]
    %v180 = vld [vmem:[#allocation2 + $0x10] sm:$0xff]
    %v181 = vld [vmem:[#allocation2 + $0x18] sm:$0xff]
    %v182 = vld [vmem:[#allocation2 + $0x20] sm:$0xff]
    %v183 = vld [vmem:[#allocation2 + $0x28] sm:$0xff]
    %v184 = vld [vmem:[#allocation2 + $0x30] sm:$0xff]
    %v185 = vld [vmem:[#allocation2 + $0x38] sm:$0xff]
    %v186 = vld [vmem:[#allocation2 + $0x40] sm:$0xff]
    %v187 = vld [vmem:[#allocation2 + $0x48] sm:$0xff]
    %v188 = vld [vmem:[#allocation2 + $0x50] sm:$0xff]
    %v189 = vld [vmem:[#allocation2 + $0x58] sm:$0xff]
    %v190 = vld [vmem:[#allocation2 + $0x60] sm:$0xff]
    %v191 = vld [vmem:[#allocation2 + $0x68] sm:$0xff]
    %v192 = vld [vmem:[#allocation2 + $0x70] sm:$0xff]
    %v193 = vld [vmem:[#allocation2 + $0x78] sm:$0xff]
    %v194 = vld [vmem:[%s3] sm:$0x1]
    %v196 = vlaneseq
    %v197 = vshrl.u32 %v196, 7
    %v198 = vsub.s32 0, %v197
    %v199 = vrot.slane %v194, %v198
    %201 = vmatprep.subr.mxu0 0.0
    %202 = vmatpush1.msra.mxu0 %v178
    %203 = vmatprep.subr.mxu0 0.0
    %204 = vmatpush1.msra.mxu0 %v179
    %205 = vmatprep.subr.mxu0 0.0
    %206 = vmatpush1.msra.mxu0 %v180
    %207 = vmatprep.subr.mxu0 0.0
    %208 = vmatpush1.msra.mxu0 %v181
    %209 = vmatprep.subr.mxu0 0.0
    %210 = vmatpush1.msra.mxu0 %v182
    %211 = vmatprep.subr.mxu0 0.0
    %212 = vmatpush1.msra.mxu0 %v183
    %213 = vmatprep.subr.mxu0 0.0
    %214 = vmatpush1.msra.mxu0 %v184
    %215 = vmatprep.subr.mxu0 0.0
    %216 = vmatpush1.msra.mxu0 %v185
    %217 = vmatprep.subr.mxu0 0.0
    %218 = vmatpush1.msra.mxu0 %v186
    %219 = vmatprep.subr.mxu0 0.0
    %220 = vmatpush1.msra.mxu0 %v187
    %221 = vmatprep.subr.mxu0 0.0
    %222 = vmatpush1.msra.mxu0 %v188
    %223 = vmatprep.subr.mxu0 0.0
    %224 = vmatpush1.msra.mxu0 %v189
    %225 = vmatprep.subr.mxu0 0.0
    %226 = vmatpush1.msra.mxu0 %v190
    %227 = vmatprep.subr.mxu0 0.0
    %228 = vmatpush1.msra.mxu0 %v191
    %229 = vmatprep.subr.mxu0 0.0
    %230 = vmatpush1.msra.mxu0 %v192
    %231 = vmatprep.subr.mxu0 0.0
    %232 = vmatpush1.msra.mxu0 %v193
    %233 = vmatprep.subr.mxu0 0.0
    %234 = vmatpush1.msra.mxu0 0.0
    %235 = vmatprep.subr.mxu0 0.0
    %236 = vmatpush1.msra.mxu0 0.0
    %237 = vmatprep.subr.mxu0 0.0
    %238 = vmatpush1.msra.mxu0 0.0
    %239 = vmatprep.subr.mxu0 0.0
    %240 = vmatpush1.msra.mxu0 0.0
    %241 = vmatprep.subr.mxu0 0.0
    %242 = vmatpush1.msra.mxu0 0.0
    %243 = vmatprep.subr.mxu0 0.0
    %244 = vmatpush1.msra.mxu0 0.0
    %245 = vmatprep.subr.mxu0 0.0
    %246 = vmatpush1.msra.mxu0 0.0
    %247 = vmatprep.subr.mxu0 0.0
    %248 = vmatpush1.msra.mxu0 0.0
    %249 = vmatprep.subr.mxu0 0.0
    %250 = vmatpush1.msra.mxu0 0.0
    %251 = vmatprep.subr.mxu0 0.0
    %252 = vmatpush1.msra.mxu0 0.0
    %253 = vmatprep.subr.mxu0 0.0
    %254 = vmatpush1.msra.mxu0 0.0
    %255 = vmatprep.subr.mxu0 0.0
    %256 = vmatpush1.msra.mxu0 0.0
    %257 = vmatprep.subr.mxu0 0.0
    %258 = vmatpush1.msra.mxu0 0.0
    %259 = vmatprep.subr.mxu0 0.0
    %260 = vmatpush1.msra.mxu0 0.0
    %261 = vmatprep.subr.mxu0 0.0
    %262 = vmatpush1.msra.mxu0 0.0
    %263 = vmatprep.subr.mxu0 0.0
    %264 = vmatpush1.msra.mxu0 0.0
    %265 = vmatprep.mubr.f32.mxu0 0.0
    %266 = vmatmul.mubr.f32.gmra.mrb[0].mxu0 %v199
    %v267 = vpop.f32.mrb[0].mxu0
    %v268 = vadd.f32 0.0, %v267
    %v269 = vpop.f32.mrb[0].mxu0
    %270 = vdwg.mxu0
    %v271 = vadd.f32 %v140, %v268
    %v272 = vxor.u32 %v271, 2147483648
    %v273 = vmul.f32 %v272, 1.442695
    %v274 = vpow.pop %v273
    %v275 = vadd.f32 %v274, 1.0
    %v276 = vrcp.pop %v275
    %v277 = vmul.f32 1.0, %v276
    %v278 = vmul.f32 %v199, 0.98
    %v279 = vmul.f32 %v277, 0.02
    %v280 = vadd.f32 %v278, %v279
    %281 = vst [vmem:[#allocation5] sm:$0xff] %v280
    %282 = vmatprep.subr.mxu0 0.0
    %283 = vmatpush1.msra.mxu0 %v178
    %284 = vmatprep.subr.mxu0 0.0
    %285 = vmatpush1.msra.mxu0 %v179
    %286 = vmatprep.subr.mxu0 0.0
    %287 = vmatpush1.msra.mxu0 %v180
    %288 = vmatprep.subr.mxu0 0.0
    %289 = vmatpush1.msra.mxu0 %v181
    %290 = vmatprep.subr.mxu0 0.0
    %291 = vmatpush1.msra.mxu0 %v182
    %292 = vmatprep.subr.mxu0 0.0
    %293 = vmatpush1.msra.mxu0 %v183
    %294 = vmatprep.subr.mxu0 0.0
    %295 = vmatpush1.msra.mxu0 %v184
    %296 = vmatprep.subr.mxu0 0.0
    %297 = vmatpush1.msra.mxu0 %v185
    %298 = vmatprep.subr.mxu0 0.0
    %299 = vmatpush1.msra.mxu0 %v186
    %300 = vmatprep.subr.mxu0 0.0
    %301 = vmatpush1.msra.mxu0 %v187
    %302 = vmatprep.subr.mxu0 0.0
    %303 = vmatpush1.msra.mxu0 %v188
    %304 = vmatprep.subr.mxu0 0.0
    %305 = vmatpush1.msra.mxu0 %v189
    %306 = vmatprep.subr.mxu0 0.0
    %307 = vmatpush1.msra.mxu0 %v190
    %308 = vmatprep.subr.mxu0 0.0
    %309 = vmatpush1.msra.mxu0 %v191
    %310 = vmatprep.subr.mxu0 0.0
    %311 = vmatpush1.msra.mxu0 %v192
    %312 = vmatprep.subr.mxu0 0.0
    %313 = vmatpush1.msra.mxu0 %v193
    %314 = vmatprep.subr.mxu0 0.0
    %315 = vmatpush1.msra.mxu0 0.0
    %316 = vmatprep.subr.mxu0 0.0
    %317 = vmatpush1.msra.mxu0 0.0
    %318 = vmatprep.subr.mxu0 0.0
    %319 = vmatpush1.msra.mxu0 0.0
    %320 = vmatprep.subr.mxu0 0.0
    %321 = vmatpush1.msra.mxu0 0.0
    %322 = vmatprep.subr.mxu0 0.0
    %323 = vmatpush1.msra.mxu0 0.0
    %324 = vmatprep.subr.mxu0 0.0
    %325 = vmatpush1.msra.mxu0 0.0
    %326 = vmatprep.subr.mxu0 0.0
    %327 = vmatpush1.msra.mxu0 0.0
    %328 = vmatprep.subr.mxu0 0.0
    %329 = vmatpush1.msra.mxu0 0.0
    %330 = vmatprep.subr.mxu0 0.0
    %331 = vmatpush1.msra.mxu0 0.0
    %332 = vmatprep.subr.mxu0 0.0
    %333 = vmatpush1.msra.mxu0 0.0
    %334 = vmatprep.subr.mxu0 0.0
    %335 = vmatpush1.msra.mxu0 0.0
    %336 = vmatprep.subr.mxu0 0.0
    %337 = vmatpush1.msra.mxu0 0.0
    %338 = vmatprep.subr.mxu0 0.0
    %339 = vmatpush1.msra.mxu0 0.0
    %340 = vmatprep.subr.mxu0 0.0
    %341 = vmatpush1.msra.mxu0 0.0
    %342 = vmatprep.subr.mxu0 0.0
    %343 = vmatpush1.msra.mxu0 0.0
    %344 = vmatprep.subr.mxu0 0.0
    %345 = vmatpush1.msra.mxu0 0.0
    %346 = vmatprep.mubr.f32.mxu0 0.0
    %347 = vmatmul.mubr.f32.gmra.mrb[0].mxu0 %v280
    %v348 = vpop.f32.mrb[0].mxu0
    %v349 = vadd.f32 0.0, %v348
    %v350 = vpop.f32.mrb[0].mxu0
    %351 = vdwg.mxu0
    %v352 = vadd.f32 %v145, %v349
    %v353 = vxor.u32 %v352, 2147483648
    %v354 = vmul.f32 %v353, 1.442695
    %v355 = vpow.pop %v354
    %v356 = vadd.f32 %v355, 1.0
    %v357 = vrcp.pop %v356
    %v358 = vmul.f32 1.0, %v357
    %v359 = vmul.f32 %v280, 0.98
    %v360 = vmul.f32 %v358, 0.02
    %v361 = vadd.f32 %v359, %v360
    %362 = vst [vmem:[#allocation5 + $0x8] sm:$0xff] %v361
    %363 = vmatprep.subr.mxu0 0.0
    %364 = vmatpush1.msra.mxu0 %v178
    %365 = vmatprep.subr.mxu0 0.0
    %366 = vmatpush1.msra.mxu0 %v179
    %367 = vmatprep.subr.mxu0 0.0
    %368 = vmatpush1.msra.mxu0 %v180
    %369 = vmatprep.subr.mxu0 0.0
    %370 = vmatpush1.msra.mxu0 %v181
    %371 = vmatprep.subr.mxu0 0.0
    %372 = vmatpush1.msra.mxu0 %v182
    %373 = vmatprep.subr.mxu0 0.0
    %374 = vmatpush1.msra.mxu0 %v183
    %375 = vmatprep.subr.mxu0 0.0
    %376 = vmatpush1.msra.mxu0 %v184
    %377 = vmatprep.subr.mxu0 0.0
    %378 = vmatpush1.msra.mxu0 %v185
    %379 = vmatprep.subr.mxu0 0.0
    %380 = vmatpush1.msra.mxu0 %v186
    %381 = vmatprep.subr.mxu0 0.0
    %382 = vmatpush1.msra.mxu0 %v187
    %383 = vmatprep.subr.mxu0 0.0
    %384 = vmatpush1.msra.mxu0 %v188
    %385 = vmatprep.subr.mxu0 0.0
    %386 = vmatpush1.msra.mxu0 %v189
    %387 = vmatprep.subr.mxu0 0.0
    %388 = vmatpush1.msra.mxu0 %v190
    %389 = vmatprep.subr.mxu0 0.0
    %390 = vmatpush1.msra.mxu0 %v191
    %391 = vmatprep.subr.mxu0 0.0
    %392 = vmatpush1.msra.mxu0 %v192
    %393 = vmatprep.subr.mxu0 0.0
    %394 = vmatpush1.msra.mxu0 %v193
    %395 = vmatprep.subr.mxu0 0.0
    %396 = vmatpush1.msra.mxu0 0.0
    %397 = vmatprep.subr.mxu0 0.0
    %398 = vmatpush1.msra.mxu0 0.0
    %399 = vmatprep.subr.mxu0 0.0
    %400 = vmatpush1.msra.mxu0 0.0
    %401 = vmatprep.subr.mxu0 0.0
    %402 = vmatpush1.msra.mxu0 0.0
    %403 = vmatprep.subr.mxu0 0.0
    %404 = vmatpush1.msra.mxu0 0.0
    %405 = vmatprep.subr.mxu0 0.0
    %406 = vmatpush1.msra.mxu0 0.0
    %407 = vmatprep.subr.mxu0 0.0
    %408 = vmatpush1.msra.mxu0 0.0
    %409 = vmatprep.subr.mxu0 0.0
    %410 = vmatpush1.msra.mxu0 0.0
    %411 = vmatprep.subr.mxu0 0.0
    %412 = vmatpush1.msra.mxu0 0.0
    %413 = vmatprep.subr.mxu0 0.0
    %414 = vmatpush1.msra.mxu0 0.0
    %415 = vmatprep.subr.mxu0 0.0
    %416 = vmatpush1.msra.mxu0 0.0
    %417 = vmatprep.subr.mxu0 0.0
    %418 = vmatpush1.msra.mxu0 0.0
    %419 = vmatprep.subr.mxu0 0.0
    %420 = vmatpush1.msra.mxu0 0.0
    %421 = vmatprep.subr.mxu0 0.0
    %422 = vmatpush1.msra.mxu0 0.0
    %423 = vmatprep.subr.mxu0 0.0
    %424 = vmatpush1.msra.mxu0 0.0
    %425 = vmatprep.subr.mxu0 0.0
    %426 = vmatpush1.msra.mxu0 0.0
    %427 = vmatprep.mubr.f32.mxu0 0.0
    %428 = vmatmul.mubr.f32.gmra.mrb[0].mxu0 %v361
    %v429 = vpop.f32.mrb[0].mxu0
    %v430 = vadd.f32 0.0, %v429
    %v431 = vpop.f32.mrb[0].mxu0
    %432 = vdwg.mxu0
    %v433 = vadd.f32 %v150, %v430
    %v434 = vxor.u32 %v433, 2147483648
    %v435 = vmul.f32 %v434, 1.442695
    %v436 = vpow.pop %v435
    %v437 = vadd.f32 %v436, 1.0
    %v438 = vrcp.pop %v437
    %v439 = vmul.f32 1.0, %v438
    %v440 = vmul.f32 %v361, 0.98
    %v441 = vmul.f32 %v439, 0.02
    %v442 = vadd.f32 %v440, %v441
    %443 = vst [vmem:[#allocation5 + $0x10] sm:$0xff] %v442
    %444 = vmatprep.subr.mxu0 0.0
    %445 = vmatpush1.msra.mxu0 %v178
    %446 = vmatprep.subr.mxu0 0.0
    %447 = vmatpush1.msra.mxu0 %v179
    %448 = vmatprep.subr.mxu0 0.0
    %449 = vmatpush1.msra.mxu0 %v180
    %450 = vmatprep.subr.mxu0 0.0
    %451 = vmatpush1.msra.mxu0 %v181
    %452 = vmatprep.subr.mxu0 0.0
    %453 = vmatpush1.msra.mxu0 %v182
    %454 = vmatprep.subr.mxu0 0.0
    %455 = vmatpush1.msra.mxu0 %v183
    %456 = vmatprep.subr.mxu0 0.0
    %457 = vmatpush1.msra.mxu0 %v184
    %458 = vmatprep.subr.mxu0 0.0
    %459 = vmatpush1.msra.mxu0 %v185
    %460 = vmatprep.subr.mxu0 0.0
    %461 = vmatpush1.msra.mxu0 %v186
    %462 = vmatprep.subr.mxu0 0.0
    %463 = vmatpush1.msra.mxu0 %v187
    %464 = vmatprep.subr.mxu0 0.0
    %465 = vmatpush1.msra.mxu0 %v188
    %466 = vmatprep.subr.mxu0 0.0
    %467 = vmatpush1.msra.mxu0 %v189
    %468 = vmatprep.subr.mxu0 0.0
    %469 = vmatpush1.msra.mxu0 %v190
    %470 = vmatprep.subr.mxu0 0.0
    %471 = vmatpush1.msra.mxu0 %v191
    %472 = vmatprep.subr.mxu0 0.0
    %473 = vmatpush1.msra.mxu0 %v192
    %474 = vmatprep.subr.mxu0 0.0
    %475 = vmatpush1.msra.mxu0 %v193
    %476 = vmatprep.subr.mxu0 0.0
    %477 = vmatpush1.msra.mxu0 0.0
    %478 = vmatprep.subr.mxu0 0.0
    %479 = vmatpush1.msra.mxu0 0.0
    %480 = vmatprep.subr.mxu0 0.0
    %481 = vmatpush1.msra.mxu0 0.0
    %482 = vmatprep.subr.mxu0 0.0
    %483 = vmatpush1.msra.mxu0 0.0
    %484 = vmatprep.subr.mxu0 0.0
    %485 = vmatpush1.msra.mxu0 0.0
    %486 = vmatprep.subr.mxu0 0.0
    %487 = vmatpush1.msra.mxu0 0.0
    %488 = vmatprep.subr.mxu0 0.0
    %489 = vmatpush1.msra.mxu0 0.0
    %490 = vmatprep.subr.mxu0 0.0
    %491 = vmatpush1.msra.mxu0 0.0
    %492 = vmatprep.subr.mxu0 0.0
    %493 = vmatpush1.msra.mxu0 0.0
    %494 = vmatprep.subr.mxu0 0.0
    %495 = vmatpush1.msra.mxu0 0.0
    %496 = vmatprep.subr.mxu0 0.0
    %497 = vmatpush1.msra.mxu0 0.0
    %498 = vmatprep.subr.mxu0 0.0
    %499 = vmatpush1.msra.mxu0 0.0
    %500 = vmatprep.subr.mxu0 0.0
    %501 = vmatpush1.msra.mxu0 0.0
    %502 = vmatprep.subr.mxu0 0.0
    %503 = vmatpush1.msra.mxu0 0.0
    %504 = vmatprep.subr.mxu0 0.0
    %505 = vmatpush1.msra.mxu0 0.0
    %506 = vmatprep.subr.mxu0 0.0
    %507 = vmatpush1.msra.mxu0 0.0
    %508 = vmatprep.mubr.f32.mxu0 0.0
    %509 = vmatmul.mubr.f32.gmra.mrb[0].mxu0 %v442
    %v510 = vpop.f32.mrb[0].mxu0
    %v511 = vadd.f32 0.0, %v510
    %v512 = vpop.f32.mrb[0].mxu0
    %513 = vdwg.mxu0
    %v514 = vadd.f32 %v155, %v511
    %v515 = vxor.u32 %v514, 2147483648
    %v516 = vmul.f32 %v515, 1.442695
    %v517 = vpow.pop %v516
    %v518 = vadd.f32 %v517, 1.0
    %v519 = vrcp.pop %v518
    %v520 = vmul.f32 1.0, %v519
    %v521 = vmul.f32 %v442, 0.98
    %v522 = vmul.f32 %v520, 0.02
    %v523 = vadd.f32 %v521, %v522
    %524 = vst [vmem:[#allocation5 + $0x18] sm:$0xff] %v523
    %525 = vmatprep.subr.mxu0 0.0
    %526 = vmatpush1.msra.mxu0 %v178
    %527 = vmatprep.subr.mxu0 0.0
    %528 = vmatpush1.msra.mxu0 %v179
    %529 = vmatprep.subr.mxu0 0.0
    %530 = vmatpush1.msra.mxu0 %v180
    %531 = vmatprep.subr.mxu0 0.0
    %532 = vmatpush1.msra.mxu0 %v181
    %533 = vmatprep.subr.mxu0 0.0
    %534 = vmatpush1.msra.mxu0 %v182
    %535 = vmatprep.subr.mxu0 0.0
    %536 = vmatpush1.msra.mxu0 %v183
    %537 = vmatprep.subr.mxu0 0.0
    %538 = vmatpush1.msra.mxu0 %v184
    %539 = vmatprep.subr.mxu0 0.0
    %540 = vmatpush1.msra.mxu0 %v185
    %541 = vmatprep.subr.mxu0 0.0
    %542 = vmatpush1.msra.mxu0 %v186
    %543 = vmatprep.subr.mxu0 0.0
    %544 = vmatpush1.msra.mxu0 %v187
    %545 = vmatprep.subr.mxu0 0.0
    %546 = vmatpush1.msra.mxu0 %v188
    %547 = vmatprep.subr.mxu0 0.0
    %548 = vmatpush1.msra.mxu0 %v189
    %549 = vmatprep.subr.mxu0 0.0
    %550 = vmatpush1.msra.mxu0 %v190
    %551 = vmatprep.subr.mxu0 0.0
    %552 = vmatpush1.msra.mxu0 %v191
    %553 = vmatprep.subr.mxu0 0.0
    %554 = vmatpush1.msra.mxu0 %v192
    %555 = vmatprep.subr.mxu0 0.0
    %556 = vmatpush1.msra.mxu0 %v193
    %557 = vmatprep.subr.mxu0 0.0
    %558 = vmatpush1.msra.mxu0 0.0
    %559 = vmatprep.subr.mxu0 0.0
    %560 = vmatpush1.msra.mxu0 0.0
    %561 = vmatprep.subr.mxu0 0.0
    %562 = vmatpush1.msra.mxu0 0.0
    %563 = vmatprep.subr.mxu0 0.0
    %564 = vmatpush1.msra.mxu0 0.0
    %565 = vmatprep.subr.mxu0 0.0
    %566 = vmatpush1.msra.mxu0 0.0
    %567 = vmatprep.subr.mxu0 0.0
    %568 = vmatpush1.msra.mxu0 0.0
    %569 = vmatprep.subr.mxu0 0.0
    %570 = vmatpush1.msra.mxu0 0.0
    %571 = vmatprep.subr.mxu0 0.0
    %572 = vmatpush1.msra.mxu0 0.0
    %573 = vmatprep.subr.mxu0 0.0
    %574 = vmatpush1.msra.mxu0 0.0
    %575 = vmatprep.subr.mxu0 0.0
    %576 = vmatpush1.msra.mxu0 0.0
    %577 = vmatprep.subr.mxu0 0.0
    %578 = vmatpush1.msra.mxu0 0.0
    %579 = vmatprep.subr.mxu0 0.0
    %580 = vmatpush1.msra.mxu0 0.0
    %581 = vmatprep.subr.mxu0 0.0
    %582 = vmatpush1.msra.mxu0 0.0
    %583 = vmatprep.subr.mxu0 0.0
    %584 = vmatpush1.msra.mxu0 0.0
    %585 = vmatprep.subr.mxu0 0.0
    %586 = vmatpush1.msra.mxu0 0.0
    %587 = vmatprep.subr.mxu0 0.0
    %588 = vmatpush1.msra.mxu0 0.0
    %589 = vmatprep.mubr.f32.mxu0 0.0
    %590 = vmatmul.mubr.f32.gmra.mrb[0].mxu0 %v523
    %v591 = vpop.f32.mrb[0].mxu0
    %v592 = vadd.f32 0.0, %v591
    %v593 = vpop.f32.mrb[0].mxu0
    %594 = vdwg.mxu0
    %v595 = vadd.f32 %v160, %v592
    %v596 = vxor.u32 %v595, 2147483648
    %v597 = vmul.f32 %v596, 1.442695
    %v598 = vpow.pop %v597
    %v599 = vadd.f32 %v598, 1.0
    %v600 = vrcp.pop %v599
    %v601 = vmul.f32 1.0, %v600
    %v602 = vmul.f32 %v523, 0.98
    %v603 = vmul.f32 %v601, 0.02
    %v604 = vadd.f32 %v602, %v603
    %605 = vst [vmem:[#allocation5 + $0x20] sm:$0xff] %v604
    %606 = vmatprep.subr.mxu0 0.0
    %607 = vmatpush1.msra.mxu0 %v178
    %608 = vmatprep.subr.mxu0 0.0
    %609 = vmatpush1.msra.mxu0 %v179
    %610 = vmatprep.subr.mxu0 0.0
    %611 = vmatpush1.msra.mxu0 %v180
    %612 = vmatprep.subr.mxu0 0.0
    %613 = vmatpush1.msra.mxu0 %v181
    %614 = vmatprep.subr.mxu0 0.0
    %615 = vmatpush1.msra.mxu0 %v182
    %616 = vmatprep.subr.mxu0 0.0
    %617 = vmatpush1.msra.mxu0 %v183
    %618 = vmatprep.subr.mxu0 0.0
    %619 = vmatpush1.msra.mxu0 %v184
    %620 = vmatprep.subr.mxu0 0.0
    %621 = vmatpush1.msra.mxu0 %v185
    %622 = vmatprep.subr.mxu0 0.0
    %623 = vmatpush1.msra.mxu0 %v186
    %624 = vmatprep.subr.mxu0 0.0
    %625 = vmatpush1.msra.mxu0 %v187
    %626 = vmatprep.subr.mxu0 0.0
    %627 = vmatpush1.msra.mxu0 %v188
    %628 = vmatprep.subr.mxu0 0.0
    %629 = vmatpush1.msra.mxu0 %v189
    %630 = vmatprep.subr.mxu0 0.0
    %631 = vmatpush1.msra.mxu0 %v190
    %632 = vmatprep.subr.mxu0 0.0
    %633 = vmatpush1.msra.mxu0 %v191
    %634 = vmatprep.subr.mxu0 0.0
    %635 = vmatpush1.msra.mxu0 %v192
    %636 = vmatprep.subr.mxu0 0.0
    %637 = vmatpush1.msra.mxu0 %v193
    %638 = vmatprep.subr.mxu0 0.0
    %639 = vmatpush1.msra.mxu0 0.0
    %640 = vmatprep.subr.mxu0 0.0
    %641 = vmatpush1.msra.mxu0 0.0
    %642 = vmatprep.subr.mxu0 0.0
    %643 = vmatpush1.msra.mxu0 0.0
    %644 = vmatprep.subr.mxu0 0.0
    %645 = vmatpush1.msra.mxu0 0.0
    %646 = vmatprep.subr.mxu0 0.0
    %647 = vmatpush1.msra.mxu0 0.0
    %648 = vmatprep.subr.mxu0 0.0
    %649 = vmatpush1.msra.mxu0 0.0
    %650 = vmatprep.subr.mxu0 0.0
    %651 = vmatpush1.msra.mxu0 0.0
    %652 = vmatprep.subr.mxu0 0.0
    %653 = vmatpush1.msra.mxu0 0.0
    %654 = vmatprep.subr.mxu0 0.0
    %655 = vmatpush1.msra.mxu0 0.0
    %656 = vmatprep.subr.mxu0 0.0
    %657 = vmatpush1.msra.mxu0 0.0
    %658 = vmatprep.subr.mxu0 0.0
    %659 = vmatpush1.msra.mxu0 0.0
    %660 = vmatprep.subr.mxu0 0.0
    %661 = vmatpush1.msra.mxu0 0.0
    %662 = vmatprep.subr.mxu0 0.0
    %663 = vmatpush1.msra.mxu0 0.0
    %664 = vmatprep.subr.mxu0 0.0
    %665 = vmatpush1.msra.mxu0 0.0
    %666 = vmatprep.subr.mxu0 0.0
    %667 = vmatpush1.msra.mxu0 0.0
    %668 = vmatprep.subr.mxu0 0.0
    %669 = vmatpush1.msra.mxu0 0.0
    %670 = vmatprep.mubr.f32.mxu0 0.0
    %671 = vmatmul.mubr.f32.gmra.mrb[0].mxu0 %v604
    %v672 = vpop.f32.mrb[0].mxu0
    %v673 = vadd.f32 0.0, %v672
    %v674 = vpop.f32.mrb[0].mxu0
    %675 = vdwg.mxu0
    %v676 = vadd.f32 %v165, %v673
    %v677 = vxor.u32 %v676, 2147483648
    %v678 = vmul.f32 %v677, 1.442695
    %v679 = vpow.pop %v678
    %v680 = vadd.f32 %v679, 1.0
    %v681 = vrcp.pop %v680
    %v682 = vmul.f32 1.0, %v681
    %v683 = vmul.f32 %v604, 0.98
    %v684 = vmul.f32 %v682, 0.02
    %v685 = vadd.f32 %v683, %v684
    %686 = vst [vmem:[#allocation5 + $0x28] sm:$0xff] %v685
    %687 = vmatprep.subr.mxu0 0.0
    %688 = vmatpush1.msra.mxu0 %v178
    %689 = vmatprep.subr.mxu0 0.0
    %690 = vmatpush1.msra.mxu0 %v179
    %691 = vmatprep.subr.mxu0 0.0
    %692 = vmatpush1.msra.mxu0 %v180
    %693 = vmatprep.subr.mxu0 0.0
    %694 = vmatpush1.msra.mxu0 %v181
    %695 = vmatprep.subr.mxu0 0.0
    %696 = vmatpush1.msra.mxu0 %v182
    %697 = vmatprep.subr.mxu0 0.0
    %698 = vmatpush1.msra.mxu0 %v183
    %699 = vmatprep.subr.mxu0 0.0
    %700 = vmatpush1.msra.mxu0 %v184
    %701 = vmatprep.subr.mxu0 0.0
    %702 = vmatpush1.msra.mxu0 %v185
    %703 = vmatprep.subr.mxu0 0.0
    %704 = vmatpush1.msra.mxu0 %v186
    %705 = vmatprep.subr.mxu0 0.0
    %706 = vmatpush1.msra.mxu0 %v187
    %707 = vmatprep.subr.mxu0 0.0
    %708 = vmatpush1.msra.mxu0 %v188
    %709 = vmatprep.subr.mxu0 0.0
    %710 = vmatpush1.msra.mxu0 %v189
    %711 = vmatprep.subr.mxu0 0.0
    %712 = vmatpush1.msra.mxu0 %v190
    %713 = vmatprep.subr.mxu0 0.0
    %714 = vmatpush1.msra.mxu0 %v191
    %715 = vmatprep.subr.mxu0 0.0
    %716 = vmatpush1.msra.mxu0 %v192
    %717 = vmatprep.subr.mxu0 0.0
    %718 = vmatpush1.msra.mxu0 %v193
    %719 = vmatprep.subr.mxu0 0.0
    %720 = vmatpush1.msra.mxu0 0.0
    %721 = vmatprep.subr.mxu0 0.0
    %722 = vmatpush1.msra.mxu0 0.0
    %723 = vmatprep.subr.mxu0 0.0
    %724 = vmatpush1.msra.mxu0 0.0
    %725 = vmatprep.subr.mxu0 0.0
    %726 = vmatpush1.msra.mxu0 0.0
    %727 = vmatprep.subr.mxu0 0.0
    %728 = vmatpush1.msra.mxu0 0.0
    %729 = vmatprep.subr.mxu0 0.0
    %730 = vmatpush1.msra.mxu0 0.0
    %731 = vmatprep.subr.mxu0 0.0
    %732 = vmatpush1.msra.mxu0 0.0
    %733 = vmatprep.subr.mxu0 0.0
    %734 = vmatpush1.msra.mxu0 0.0
    %735 = vmatprep.subr.mxu0 0.0
    %736 = vmatpush1.msra.mxu0 0.0
    %737 = vmatprep.subr.mxu0 0.0
    %738 = vmatpush1.msra.mxu0 0.0
    %739 = vmatprep.subr.mxu0 0.0
    %740 = vmatpush1.msra.mxu0 0.0
    %741 = vmatprep.subr.mxu0 0.0
    %742 = vmatpush1.msra.mxu0 0.0
    %743 = vmatprep.subr.mxu0 0.0
    %744 = vmatpush1.msra.mxu0 0.0
    %745 = vmatprep.subr.mxu0 0.0
    %746 = vmatpush1.msra.mxu0 0.0
    %747 = vmatprep.subr.mxu0 0.0
    %748 = vmatpush1.msra.mxu0 0.0
    %749 = vmatprep.subr.mxu0 0.0
    %750 = vmatpush1.msra.mxu0 0.0
    %751 = vmatprep.mubr.f32.mxu0 0.0
    %752 = vmatmul.mubr.f32.gmra.mrb[0].mxu0 %v685
    %v753 = vpop.f32.mrb[0].mxu0
    %v754 = vadd.f32 0.0, %v753
    %v755 = vpop.f32.mrb[0].mxu0
    %756 = vdwg.mxu0
    %v757 = vadd.f32 %v170, %v754
    %v758 = vxor.u32 %v757, 2147483648
    %v759 = vmul.f32 %v758, 1.442695
    %v760 = vpow.pop %v759
    %v761 = vadd.f32 %v760, 1.0
    %v762 = vrcp.pop %v761
    %v763 = vmul.f32 1.0, %v762
    %v764 = vmul.f32 %v685, 0.98
    %v765 = vmul.f32 %v763, 0.02
    %v766 = vadd.f32 %v764, %v765
    %767 = vst [vmem:[#allocation5 + $0x30] sm:$0xff] %v766
    %768 = vmatprep.subr.mxu0 0.0
    %769 = vmatpush1.msra.mxu0 %v178
    %770 = vmatprep.subr.mxu0 0.0
    %771 = vmatpush1.msra.mxu0 %v179
    %772 = vmatprep.subr.mxu0 0.0
    %773 = vmatpush1.msra.mxu0 %v180
    %774 = vmatprep.subr.mxu0 0.0
    %775 = vmatpush1.msra.mxu0 %v181
    %776 = vmatprep.subr.mxu0 0.0
    %777 = vmatpush1.msra.mxu0 %v182
    %778 = vmatprep.subr.mxu0 0.0
    %779 = vmatpush1.msra.mxu0 %v183
    %780 = vmatprep.subr.mxu0 0.0
    %781 = vmatpush1.msra.mxu0 %v184
    %782 = vmatprep.subr.mxu0 0.0
    %783 = vmatpush1.msra.mxu0 %v185
    %784 = vmatprep.subr.mxu0 0.0
    %785 = vmatpush1.msra.mxu0 %v186
    %786 = vmatprep.subr.mxu0 0.0
    %787 = vmatpush1.msra.mxu0 %v187
    %788 = vmatprep.subr.mxu0 0.0
    %789 = vmatpush1.msra.mxu0 %v188
    %790 = vmatprep.subr.mxu0 0.0
    %791 = vmatpush1.msra.mxu0 %v189
    %792 = vmatprep.subr.mxu0 0.0
    %793 = vmatpush1.msra.mxu0 %v190
    %794 = vmatprep.subr.mxu0 0.0
    %795 = vmatpush1.msra.mxu0 %v191
    %796 = vmatprep.subr.mxu0 0.0
    %797 = vmatpush1.msra.mxu0 %v192
    %798 = vmatprep.subr.mxu0 0.0
    %799 = vmatpush1.msra.mxu0 %v193
    %800 = vmatprep.subr.mxu0 0.0
    %801 = vmatpush1.msra.mxu0 0.0
    %802 = vmatprep.subr.mxu0 0.0
    %803 = vmatpush1.msra.mxu0 0.0
    %804 = vmatprep.subr.mxu0 0.0
    %805 = vmatpush1.msra.mxu0 0.0
    %806 = vmatprep.subr.mxu0 0.0
    %807 = vmatpush1.msra.mxu0 0.0
    %808 = vmatprep.subr.mxu0 0.0
    %809 = vmatpush1.msra.mxu0 0.0
    %810 = vmatprep.subr.mxu0 0.0
    %811 = vmatpush1.msra.mxu0 0.0
    %812 = vmatprep.subr.mxu0 0.0
    %813 = vmatpush1.msra.mxu0 0.0
    %814 = vmatprep.subr.mxu0 0.0
    %815 = vmatpush1.msra.mxu0 0.0
    %816 = vmatprep.subr.mxu0 0.0
    %817 = vmatpush1.msra.mxu0 0.0
    %818 = vmatprep.subr.mxu0 0.0
    %819 = vmatpush1.msra.mxu0 0.0
    %820 = vmatprep.subr.mxu0 0.0
    %821 = vmatpush1.msra.mxu0 0.0
    %822 = vmatprep.subr.mxu0 0.0
    %823 = vmatpush1.msra.mxu0 0.0
    %824 = vmatprep.subr.mxu0 0.0
    %825 = vmatpush1.msra.mxu0 0.0
    %826 = vmatprep.subr.mxu0 0.0
    %827 = vmatpush1.msra.mxu0 0.0
    %828 = vmatprep.subr.mxu0 0.0
    %829 = vmatpush1.msra.mxu0 0.0
    %830 = vmatprep.subr.mxu0 0.0
    %831 = vmatpush1.msra.mxu0 0.0
    %832 = vmatprep.mubr.f32.mxu0 0.0
    %833 = vmatmul.mubr.f32.gmra.mrb[0].mxu0 %v766
    %v834 = vpop.f32.mrb[0].mxu0
    %v835 = vadd.f32 0.0, %v834
    %v836 = vpop.f32.mrb[0].mxu0
    %837 = vdwg.mxu0
    %v838 = vadd.f32 %v175, %v835
    %v839 = vxor.u32 %v838, 2147483648
    %v840 = vmul.f32 %v839, 1.442695
    %v841 = vpow.pop %v840
    %v842 = vadd.f32 %v841, 1.0
    %v843 = vrcp.pop %v842
    %v844 = vmul.f32 1.0, %v843
    %v845 = vmul.f32 %v766, 0.98
    %v846 = vmul.f32 %v844, 0.02
    %v847 = vadd.f32 %v845, %v846
    %848 = vst [vmem:[#allocation5 + $0x38] sm:$0xff] %v847
    %v849 = vld [vmem:[#allocation5] sm:$0xff]
    %v850 = vld [vmem:[#allocation5 + $0x8] sm:$0xff]
    %v851 = vld [vmem:[#allocation5 + $0x10] sm:$0xff]
    %v852 = vld [vmem:[#allocation5 + $0x18] sm:$0xff]
    %v853 = vld [vmem:[#allocation5 + $0x20] sm:$0xff]
    %v854 = vld [vmem:[#allocation5 + $0x28] sm:$0xff]
    %v855 = vld [vmem:[#allocation5 + $0x30] sm:$0xff]
    %v856 = vld [vmem:[#allocation5 + $0x38] sm:$0xff]
    %v857 = vlaneseq
    %v858 = vand.u32 %v857, 127
    %vm859 = vcmp.lt.s32.totalorder %v858, 32
    %v860 = vsel %vm859, %v849, 0.0
    %v861 = vsel %vm859, %v850, 0.0
    %v862 = vsel %vm859, %v851, 0.0
    %v863 = vsel %vm859, %v852, 0.0
    %v864 = vsel %vm859, %v853, 0.0
    %v865 = vsel %vm859, %v854, 0.0
    %v866 = vsel %vm859, %v855, 0.0
    %v867 = vsel %vm859, %v856, 0.0
    %868 = vadd.xlane.f32.xlu0 %v860
    %v869 = vpop.xlane.xlu0 %868
    %870 = vadd.xlane.f32.xlu0 %v861
    %v871 = vpop.xlane.xlu0 %870
    %872 = vadd.xlane.f32.xlu0 %v862
    %v873 = vpop.xlane.xlu0 %872
    %874 = vadd.xlane.f32.xlu0 %v863
    %v875 = vpop.xlane.xlu0 %874
    %876 = vadd.xlane.f32.xlu0 %v864
    %v877 = vpop.xlane.xlu0 %876
    %878 = vadd.xlane.f32.xlu0 %v865
    %v879 = vpop.xlane.xlu0 %878
    %880 = vadd.xlane.f32.xlu0 %v866
    %v881 = vpop.xlane.xlu0 %880
    %882 = vadd.xlane.f32.xlu0 %v867
    %v883 = vpop.xlane.xlu0 %882
    %v884 = vmul.f32 %v869, 0.03125
    %v885 = vmul.f32 %v871, 0.03125
    %v886 = vmul.f32 %v873, 0.03125
    %v887 = vmul.f32 %v875, 0.03125
    %v888 = vmul.f32 %v877, 0.03125
    %v889 = vmul.f32 %v879, 0.03125
    %v890 = vmul.f32 %v881, 0.03125
    %v891 = vmul.f32 %v883, 0.03125
    %v892 = vsub.f32 %v849, %v884
    %v893 = vsub.f32 %v850, %v885
    %v894 = vsub.f32 %v851, %v886
    %v895 = vsub.f32 %v852, %v887
    %v896 = vsub.f32 %v853, %v888
    %v897 = vsub.f32 %v854, %v889
    %v898 = vsub.f32 %v855, %v890
    %v899 = vsub.f32 %v856, %v891
    %v900 = vsel %vm859, %v892, 0.0
    %v901 = vsel %vm859, %v893, 0.0
    %v902 = vsel %vm859, %v894, 0.0
    %v903 = vsel %vm859, %v895, 0.0
    %v904 = vsel %vm859, %v896, 0.0
    %v905 = vsel %vm859, %v897, 0.0
    %v906 = vsel %vm859, %v898, 0.0
    %v907 = vsel %vm859, %v899, 0.0
    %v908 = vmul.f32 %v900, %v900
    %v909 = vmul.f32 %v901, %v901
    %v910 = vmul.f32 %v902, %v902
    %v911 = vmul.f32 %v903, %v903
    %v912 = vmul.f32 %v904, %v904
    %v913 = vmul.f32 %v905, %v905
    %v914 = vmul.f32 %v906, %v906
    %v915 = vmul.f32 %v907, %v907
    %916 = vadd.xlane.f32.xlu0 %v908
    %v917 = vpop.xlane.xlu0 %916
    %918 = vadd.xlane.f32.xlu0 %v909
    %v919 = vpop.xlane.xlu0 %918
    %920 = vadd.xlane.f32.xlu0 %v910
    %v921 = vpop.xlane.xlu0 %920
    %922 = vadd.xlane.f32.xlu0 %v911
    %v923 = vpop.xlane.xlu0 %922
    %924 = vadd.xlane.f32.xlu0 %v912
    %v925 = vpop.xlane.xlu0 %924
    %926 = vadd.xlane.f32.xlu0 %v913
    %v927 = vpop.xlane.xlu0 %926
    %928 = vadd.xlane.f32.xlu0 %v914
    %v929 = vpop.xlane.xlu0 %928
    %930 = vadd.xlane.f32.xlu0 %v915
    %v931 = vpop.xlane.xlu0 %930
    %v932 = vmul.f32 %v917, 0.032258064
    %v933 = vmul.f32 %v919, 0.032258064
    %v934 = vmul.f32 %v921, 0.032258064
    %v935 = vmul.f32 %v923, 0.032258064
    %v936 = vmul.f32 %v925, 0.032258064
    %v937 = vmul.f32 %v927, 0.032258064
    %v938 = vmul.f32 %v929, 0.032258064
    %v939 = vmul.f32 %v931, 0.032258064
    %vm940 = vcmask 7168
    %941 = vst.msk [vmem:[%s5] sm:$0xff] %vm940, %v884
    %942 = vst.msk [vmem:[%s5 + $0x8] sm:$0xff] %vm940, %v885
    %943 = vst.msk [vmem:[%s5 + $0x10] sm:$0xff] %vm940, %v886
    %944 = vst.msk [vmem:[%s5 + $0x18] sm:$0xff] %vm940, %v887
    %945 = vst.msk [vmem:[%s5 + $0x20] sm:$0xff] %vm940, %v888
    %946 = vst.msk [vmem:[%s5 + $0x28] sm:$0xff] %vm940, %v889
    %947 = vst.msk [vmem:[%s5 + $0x30] sm:$0xff] %vm940, %v890
    %948 = vst.msk [vmem:[%s5 + $0x38] sm:$0xff] %vm940, %v891
    %949 = vst.msk [vmem:[%s6] sm:$0xff] %vm940, %v932
    %950 = vst.msk [vmem:[%s6 + $0x8] sm:$0xff] %vm940, %v933
    %951 = vst.msk [vmem:[%s6 + $0x10] sm:$0xff] %vm940, %v934
    %952 = vst.msk [vmem:[%s6 + $0x18] sm:$0xff] %vm940, %v935
    %953 = vst.msk [vmem:[%s6 + $0x20] sm:$0xff] %vm940, %v936
    %954 = vst.msk [vmem:[%s6 + $0x28] sm:$0xff] %vm940, %v937
    %955 = vst.msk [vmem:[%s6 + $0x30] sm:$0xff] %vm940, %v938
    %956 = vst.msk [vmem:[%s6 + $0x38] sm:$0xff] %vm940, %v939
    // Predicated region
    $region22: #{tpu_custom_call.1} parent=1 // pred_check
      _
    $region23: #{tpu_custom_call.1} parent=1 // pred_check_branch
      %958 = sbr.rel (0) target = $region25
    $region24: #{tpu_custom_call.1} parent=1 // pred_region
      %s960 = ssub.s32 1024, 1024
      %961 = vsyncadd [#allocation4], %s960
      %s962 = sshll.u32 [#allocation5], 4
      %s963 = int_to_ptr.vmem [resolvable:$true] %s962
      %968 = dma.vmem_to_hbm [thread:$0]  %s963, 1024, %s4, [#allocation4], 128, 128, 8
    $region25: #{tpu_custom_call.1} parent=1 // pred_fallthru
      _
    // Predicated region
    $region26: #{tpu_custom_call.1} parent=1 // pred_check
      _
    $region27: #{tpu_custom_call.1} parent=1 // pred_check_branch
      %970 = sbr.rel (0) target = $region29
    $region28: #{tpu_custom_call.1} parent=1 // pred_region
      _
    $region29: #{tpu_custom_call.1} parent=1 // pred_fallthru
      _
    // Predicated region
    $region30: #{tpu_custom_call.1} parent=1 // pred_check
      _
    $region31: #{tpu_custom_call.1} parent=1 // pred_check_branch
      %972 = sbr.rel (0) target = $region33
    $region32: #{tpu_custom_call.1} parent=1 // pred_region
      _
    $region33: #{tpu_custom_call.1} parent=1 // pred_fallthru
      _
    // Predicated region
    $region34: #{tpu_custom_call.1} parent=1 // pred_check
      _
    $region35: #{tpu_custom_call.1} parent=1 // pred_check_branch
      %974 = sbr.rel (0) target = $region37
    $region36: #{tpu_custom_call.1} parent=1 // pred_region
      %975 = dma.done [#allocation4], 1024
    $region37: #{tpu_custom_call.1} parent=1 // pred_fallthru
      _
    // Predicated region
    $region38: #{tpu_custom_call.1} parent=1 // pred_check
      _
    $region39: #{tpu_custom_call.1} parent=1 // pred_check_branch
      %977 = sbr.rel (0) target = $region41
    $region40: #{tpu_custom_call.1} parent=1 // pred_region
      _
    $region41: #{tpu_custom_call.1} parent=1 // pred_fallthru
      _
    // Predicated region
    $region42: #{tpu_custom_call.1} parent=1 // pred_check
      _
    $region43: #{tpu_custom_call.1} parent=1 // pred_check_branch
      %979 = sbr.rel (0) target = $region45
    $region44: #{tpu_custom_call.1} parent=1 // pred_region
      _
    $region45: #{tpu_custom_call.1} parent=1 // pred_fallthru
      _
    %980 = vsyncpa [#allocation3], 1
    %981 = vsyncpa [#allocation4], 1

</llo_original>
